<compile_context>
chip_gen: v6e
topology: v6e:2x2x1
jax: 0.10.0
libtpu: 0.0.40
codegen_flags: <defaults>
</compile_context>

<pallas_src>
import functools

import jax
import jax.numpy as jnp
from jax import lax
from jax.experimental import pallas as pl
from jax.experimental.pallas import tpu as pltpu

_LANE = 128            # vreg lane width
_SUB = 8               # vreg sublane count
_CHUNK_ROWS = 64       # inner-loop chunk: 8 vregs per operand
_MAX_ROW_TILE = 4096   # 4096 x 128 x f32 = 2 MiB per operand block
_BYPASS_ELEMS = 1 << 17


def _round_up(x, m):
    return -(-x // m) * m


def _l1_partial_kernel(yhat_ref, tgt_ref, part_ref, *, valid_rows):
    """Streaming per-grid-step L1 partial sums.

    yhat_ref / tgt_ref: (row_tile, 128) VMEM blocks.  Rows >= valid_rows (the
    ragged boundary of the last grid step) contain garbage and are masked.
    part_ref: (8, 128) f32 partial-sum block for this grid step.
    """
    row_tile = yhat_ref.shape[0]
    n_chunks = row_tile // _CHUNK_ROWS
    base = pl.program_id(0) * row_tile

    # Hoisted 2-D row-index iota (sublane axis), broadcast over lanes.
    local_row = lax.broadcasted_iota(jnp.int32, (_CHUNK_ROWS, _LANE), 0)

    def body(i, acc):
        r = pl.multiple_of(i * _CHUNK_ROWS, _CHUNK_ROWS)
        a = yhat_ref[pl.ds(r, _CHUNK_ROWS), :].astype(jnp.float32)
        b = tgt_ref[pl.ds(r, _CHUNK_ROWS), :].astype(jnp.float32)
        ok = (base + r + local_row) < valid_rows
        d = jnp.where(ok, jnp.abs(a - b), 0.0)
        # Collapse 64 rows -> 8 rows using pure VPU adds (no cross-lane work).
        return acc + d.reshape(_CHUNK_ROWS // _SUB, _SUB, _LANE).sum(axis=0)

    part_ref[...] = lax.fori_loop(
        0, n_chunks, body, jnp.zeros((_SUB, _LANE), jnp.float32), unroll=True)


def l1_loss_downsample(yhat, y, input_size, lstms_shape=3,
                       min_pallas_elems=_BYPASS_ELEMS):
    """mean(|yhat - center_crop(permute(squeeze(y, 1)))|) -> scalar float32."""
    K = lstms_shape
    s = (input_size - K) // 2

    # Crop FIRST (only the K x K spatial window of y is read), then permute
    # the small (B, T, K, K) tensor to (T, B, K, K).
    tgt = jnp.transpose(y[:, 0, :, s:s + K, s:s + K], (1, 0, 2, 3))

    n = int(yhat.size)

    # Small-n bypass: fused XLA reduce beats kernel launch + slab build.
    if n < min_pallas_elems:
        return jnp.mean(jnp.abs(yhat.astype(jnp.float32) -
                                tgt.astype(jnp.float32)))

    rows = -(-n // _LANE)

    # Largest tile that fits scoped VMEM on all generations (v5e default is the
    # binding 16 MiB), but keep >= 2 grid steps so v7x megacore can split work.
    row_tile = max(_CHUNK_ROWS,
                   min(_MAX_ROW_TILE, _round_up(-(-rows // 2), _CHUNK_ROWS)))
    grid = -(-rows // row_tile)
    padded_n = rows * _LANE          # pad only to a lane multiple

    def to_slab(x):
        flat = x.reshape(-1)                         # free: contiguous
        if padded_n != n:
            # Only when n % 128 != 0; padded zeros contribute |0 - 0| = 0.
            flat = jnp.pad(flat, (0, padded_n - n))
        return flat.reshape(rows, _LANE)             # free when no pad needed

    yhat2 = to_slab(yhat)        # kept in input dtype (bf16 stays bf16)
    tgt2 = to_slab(tgt)

    itemsize = jnp.dtype(yhat.dtype).itemsize + jnp.dtype(tgt.dtype).itemsize
    cost = pl.CostEstimate(flops=2 * n, transcendentals=0,
                           bytes_accessed=padded_n * itemsize
                           + grid * _SUB * _LANE * 4)

    partials = pl.pallas_call(
        functools.partial(_l1_partial_kernel, valid_rows=rows),
        out_shape=jax.ShapeDtypeStruct((grid * _SUB, _LANE), jnp.float32),
        grid=(grid,),
        in_specs=[
            pl.BlockSpec((row_tile, _LANE), lambda i: (i, 0)),
            pl.BlockSpec((row_tile, _LANE), lambda i: (i, 0)),
        ],
        out_specs=pl.BlockSpec((_SUB, _LANE), lambda i: (i, 0)),
        compiler_params=pltpu.CompilerParams(
            dimension_semantics=("parallel",),   # megacore split on v7x
        ),
        cost_estimate=cost,
    )(yhat2, tgt2)

    # Tiny final cross-lane reduction + mean in plain JAX.
    return jnp.sum(partials) / jnp.float32(n)


def _reference(yhat, y, input_size, K):
    s = (input_size - K) // 2
    tgt = jnp.transpose(jnp.squeeze(y, axis=1), (1, 0, 2, 3))[:, :, s:s + K, s:s + K]
    return jnp.mean(jnp.abs(yhat.astype(jnp.float32) - tgt.astype(jnp.float32)))


if __name__ == "__main__":
    key = jax.random.PRNGKey(0)
    H, K = 16, 3

    # Case 1: small, module-typical shapes (exercises the small-n bypass).
    B, T = 2, 8
    k1, k2, k3, k4 = jax.random.split(key, 4)
    y_small = jax.random.normal(k1, (B, 1, T, H, H), dtype=jnp.float32)
    yhat_small = jax.random.normal(k2, (T, B, K, K), dtype=jnp.float32)
    loss_small = jax.block_until_ready(
        l1_loss_downsample(yhat_small, y_small, input_size=H, lstms_shape=K))
    ref_small = _reference(yhat_small, y_small, H, K)
    assert jnp.allclose(loss_small, ref_small, atol=1e-5, rtol=1e-5), (loss_small, ref_small)

    # Case 2: force the Pallas path (n = 4*512*9 = 18432 -> 144 lane rows,
    # grid = 2, ragged last block, no pad needed since n % 128 == 0).
    B2, T2 = 4, 512
    y_big = jax.random.normal(k3, (B2, 1, T2, H, H), dtype=jnp.float32)
    yhat_big = jax.random.normal(k4, (T2, B2, K, K), dtype=jnp.float32)
    loss_big = jax.block_until_ready(
        l1_loss_downsample(yhat_big, y_big, input_size=H, lstms_shape=K,
                           min_pallas_elems=0))
    ref_big = _reference(yhat_big, y_big, H, K)
    assert jnp.allclose(loss_big, ref_big, atol=1e-5, rtol=1e-5), (loss_big, ref_big)

    # Case 3: Pallas path with n % 128 != 0 (lane-tail pad + in-kernel mask).
    B3, T3 = 3, 100          # n = 2700
    k5, k6 = jax.random.split(k4)
    y_odd = jax.random.normal(k5, (B3, 1, T3, H, H), dtype=jnp.float32)
    yhat_odd = jax.random.normal(k6, (T3, B3, K, K), dtype=jnp.float32)
    loss_odd = jax.block_until_ready(
        l1_loss_downsample(yhat_odd, y_odd, input_size=H, lstms_shape=K,
                           min_pallas_elems=0))
    ref_odd = _reference(yhat_odd, y_odd, H, K)
    assert jnp.allclose(loss_odd, ref_odd, atol=1e-5, rtol=1e-5), (loss_odd, ref_odd)

    print("KERNEL_OK")
</pallas_src>

<mosaic_0001>
module attributes {stable_mosaic.version = 11 : i64} {
  func.func @_l1_partial_kernel(%arg0: i32, %arg1: memref<128x128xf32, #tpu.memory_space<vmem>>, %arg2: memref<128x128xf32, #tpu.memory_space<vmem>>, %arg3: memref<8x128xf32, #tpu.memory_space<vmem>>) attributes {dimension_semantics = [#tpu.dimension_semantics<parallel>], iteration_bounds = array<i64: 2>, scalar_prefetch = 0 : i64, scratch_operands = 0 : i64, tpu.core_type = #tpu.core_type<tc>, window_params = [{transform_indices = @transform_0, window_bounds = array<i64: 128, 128>}, {transform_indices = @transform_1, window_bounds = array<i64: 128, 128>}, {transform_indices = @transform_2, window_bounds = array<i64: 8, 128>}]} {
    %c128_i32 = arith.constant 128 : i32
    %0 = arith.muli %arg0, %c128_i32 : i32
    %1 = tpu.iota {dimensions = array<i32: 0>} : vector<64x128xi32>
    %cst = arith.constant 0.000000e+00 : f32
    %2 = vector.broadcast %cst : f32 to vector<8x128xf32>
    %c0_i32 = arith.constant 0 : i32
    %c64_i32 = arith.constant 64 : i32
    %3 = arith.muli %c0_i32, %c64_i32 : i32
    %4 = tpu.assume_multiple %3, 64 : i32
    %5 = arith.index_cast %4 : i32 to index
    %c0 = arith.constant 0 : index
    %6 = vector.load %arg1[%5, %c0] : memref<128x128xf32, #tpu.memory_space<vmem>>, vector<64x128xf32>
    %7 = arith.index_cast %4 : i32 to index
    %c0_0 = arith.constant 0 : index
    %8 = vector.load %arg2[%7, %c0_0] : memref<128x128xf32, #tpu.memory_space<vmem>>, vector<64x128xf32>
    %9 = arith.addi %0, %4 : i32
    %10 = vector.broadcast %9 : i32 to vector<64x128xi32>
    %11 = arith.addi %10, %1 : vector<64x128xi32>
    %c144_i32 = arith.constant 144 : i32
    %12 = vector.broadcast %c144_i32 : i32 to vector<64x128xi32>
    %13 = arith.cmpi slt, %11, %12 : vector<64x128xi32>
    %14 = arith.subf %6, %8 : vector<64x128xf32>
    %15 = math.absf %14 : vector<64x128xf32>
    %cst_1 = arith.constant 0.000000e+00 : f32
    %16 = vector.broadcast %cst_1 : f32 to vector<64x128xf32>
    %17 = arith.select %13, %15, %16 : vector<64x128xi1>, vector<64x128xf32>
    %18 = vector.shape_cast %17 : vector<64x128xf32> to vector<8x8x128xf32>
    %cst_2 = arith.constant dense<0.000000e+00> : vector<8x128xf32>
    %19 = vector.multi_reduction <add>, %18, %cst_2 [0] : vector<8x8x128xf32> to vector<8x128xf32>
    %20 = arith.addf %2, %19 : vector<8x128xf32>
    %c1_i32 = arith.constant 1 : i32
    %c64_i32_3 = arith.constant 64 : i32
    %21 = arith.muli %c1_i32, %c64_i32_3 : i32
    %22 = tpu.assume_multiple %21, 64 : i32
    %23 = arith.index_cast %22 : i32 to index
    %c0_4 = arith.constant 0 : index
    %24 = vector.load %arg1[%23, %c0_4] : memref<128x128xf32, #tpu.memory_space<vmem>>, vector<64x128xf32>
    %25 = arith.index_cast %22 : i32 to index
    %c0_5 = arith.constant 0 : index
    %26 = vector.load %arg2[%25, %c0_5] : memref<128x128xf32, #tpu.memory_space<vmem>>, vector<64x128xf32>
    %27 = arith.addi %0, %22 : i32
    %28 = vector.broadcast %27 : i32 to vector<64x128xi32>
    %29 = arith.addi %28, %1 : vector<64x128xi32>
    %c144_i32_6 = arith.constant 144 : i32
    %30 = vector.broadcast %c144_i32_6 : i32 to vector<64x128xi32>
    %31 = arith.cmpi slt, %29, %30 : vector<64x128xi32>
    %32 = arith.subf %24, %26 : vector<64x128xf32>
    %33 = math.absf %32 : vector<64x128xf32>
    %cst_7 = arith.constant 0.000000e+00 : f32
    %34 = vector.broadcast %cst_7 : f32 to vector<64x128xf32>
    %35 = arith.select %31, %33, %34 : vector<64x128xi1>, vector<64x128xf32>
    %36 = vector.shape_cast %35 : vector<64x128xf32> to vector<8x8x128xf32>
    %cst_8 = arith.constant dense<0.000000e+00> : vector<8x128xf32>
    %37 = vector.multi_reduction <add>, %36, %cst_8 [0] : vector<8x8x128xf32> to vector<8x128xf32>
    %38 = arith.addf %20, %37 : vector<8x128xf32>
    %c2_i32 = arith.constant 2 : i32
    %c0_9 = arith.constant 0 : index
    %c0_10 = arith.constant 0 : index
    %39 = vector.load %arg3[%c0_9, %c0_10] : memref<8x128xf32, #tpu.memory_space<vmem>>, vector<8x128xf32>
    tpu.vector_store %arg3[%c0_9, %c0_10], %38 {strides = array<i32>} : memref<8x128xf32, #tpu.memory_space<vmem>>, vector<8x128xf32>,
    return
  }
  func.func @transform_0(%arg0: i32) -> (i32, i32) {
    %c0_i32 = arith.constant 0 : i32
    %c0_i32_0 = arith.constant 0 : i32
    return %arg0, %c0_i32 : i32, i32
  }
  func.func @transform_1(%arg0: i32) -> (i32, i32) {
    %c0_i32 = arith.constant 0 : i32
    %c0_i32_0 = arith.constant 0 : i32
    return %arg0, %c0_i32 : i32, i32
  }
  func.func @transform_2(%arg0: i32) -> (i32, i32) {
    %c0_i32 = arith.constant 0 : i32
    %c0_i32_0 = arith.constant 0 : i32
    return %arg0, %c0_i32 : i32, i32
  }
}

</mosaic_0001>

<llo_original>
// kernel: tpu_custom_call.1
$region0: #{tpu_custom_call.1}
  #allocation0 [shape = 'u32[]', space=smem, size = 0x4, offset = 0x4, fixed_abs, tag = 'smem constant byte address 0x4 - core index']
  #allocation1 [shape = 'u32[144,128]{1,0:T(1,128)}', space=vmem, size = 0x12000, scoped, tag = 'internal scratch']
  %s0 = inlined_call_operand.hbm [shape: f32[144,128], index: 0, kind: input, shape index: {}]
  %s1 = inlined_call_operand.hbm [shape: f32[144,128], index: 1, kind: input, shape index: {}]
  %s2 = inlined_call_operand.hbm [shape: f32[16,128], index: 2, kind: output, shape index: {}]
  %s3 = sld [smem:[#allocation0]]
  $region49: #{tpu_custom_call.1} parent=0
    _
  %s5 = ssub.s32 1, %s3
  %s6 = scalar_select 0, %s5, %s3
  $region1: #{tpu_custom_call.1} parent=0
    #allocation2 [shape = 'u8[131072]{0}', space=vmem, size = 0x20000, scoped, tag = 'input window, operand 0']
    #allocation3 [shape = 's32[2]{0}', space=sflag, size = 0x8, scoped, tag = 'scoped memory for tpu_custom_call.1']
    #allocation4 [shape = 's32[2]{0}', space=sflag, size = 0x8, scoped, tag = 'scoped memory for tpu_custom_call.1']
    #allocation5 [shape = 'u8[131072]{0}', space=vmem, size = 0x20000, scoped, tag = 'input window, operand 1']
    #allocation6 [shape = 's32[2]{0}', space=sflag, size = 0x8, scoped, tag = 'scoped memory for tpu_custom_call.1']
    #allocation7 [shape = 'u8[8192]{0}', space=vmem, size = 0x2000, scoped, tag = 'output window, operand 0']
    %7 = vsyncpa [#allocation3], 0
    %s8 = scalar_lea.sflag [#allocation3], 1
    %9 = vsyncpa %s8, 0
    %10 = vsyncpa [#allocation6], 0
    %s11 = scalar_lea.sflag [#allocation6], 1
    %12 = vsyncpa %s11, 0
    %13 = vsyncpa [#allocation4], 0
    %s14 = scalar_lea.sflag [#allocation4], 1
    %15 = vsyncpa %s14, 0
    loop: start=0, step=1, limit=4
    $region2: #{tpu_custom_call.1} parent=1 // loop_pre_header
      _
    $region3: #{tpu_custom_call.1} parent=1 // loop_header
      %s17 = sphi 0, %s21
      %p18 = scmp.ge.s32.totalorder %s17, 4
      %s27 = sphi 0, %s29
      %s30 = sphi 0, %s27
      %s31 = sphi 0, %s30
      %s47 = sphi 0, %s31
      %s53 = sphi 0, %s55
      %s56 = sphi 0, %s53
      %s57 = sphi 0, %s56
      %s73 = sphi 0, %s57
      %s79 = sphi 0, %s81
      %s82 = sphi 0, %s79
      %s83 = sphi 0, %s82
      %s99 = sphi 0, %s83
    $region4: #{tpu_custom_call.1} parent=1 // loop_header_branch
      %20 = sbr.rel (%p18) target = $region8
    $region5: #{tpu_custom_call.1} parent=1 // loop_body
      %s22 = ssub.s32 %s17, 1
      %s23 = ssub.s32 %s17, 2
      %s24 = sadd.s32 %s17, 1
      %s25 = ssub.s32 %s17, %s24
      %p26 = scmp.eq.s32.totalorder %s25, 0
      %s28 = sadd.s32 %s27, 1
      %s29 = scalar_select %p26, %s27, %s28
      %p32 = pneg %p26
      %p33 = scmp.eq.s32.totalorder %s17, 1
      %p34 = por %p32, %p33
      %p35 = scmp.ne.s32.totalorder %s27, %s30
      %p36 = scmp.eq.s32.totalorder %s17, 0
      %p37 = por %p35, %p36
      %p38 = scmp.ne.s32.totalorder %s27, %s30
      %p39 = scmp.eq.s32.totalorder %s22, 1
      %p40 = por %p38, %p39
      %p41 = scmp.ne.s32.totalorder %s30, %s31
      %p42 = scmp.eq.s32.totalorder %s22, 0
      %p43 = por %p41, %p42
      %p44 = scmp.ne.s32.totalorder %s30, %s31
      %p45 = scmp.eq.s32.totalorder %s23, 1
      %p46 = por %p44, %p45
      %p48 = scmp.ne.s32.totalorder %s31, %s47
      %p49 = scmp.eq.s32.totalorder %s23, 0
      %p50 = por %p48, %p49
      %s51 = ssub.s32 %s17, %s24
      %p52 = scmp.eq.s32.totalorder %s51, 0
      %s54 = sadd.s32 %s53, 1
      %s55 = scalar_select %p52, %s53, %s54
      %p58 = pneg %p52
      %p59 = scmp.eq.s32.totalorder %s17, 1
      %p60 = por %p58, %p59
      %p61 = scmp.ne.s32.totalorder %s53, %s56
      %p62 = scmp.eq.s32.totalorder %s17, 0
      %p63 = por %p61, %p62
      %p64 = scmp.ne.s32.totalorder %s53, %s56
      %p65 = scmp.eq.s32.totalorder %s22, 1
      %p66 = por %p64, %p65
      %p67 = scmp.ne.s32.totalorder %s56, %s57
      %p68 = scmp.eq.s32.totalorder %s22, 0
      %p69 = por %p67, %p68
      %p70 = scmp.ne.s32.totalorder %s56, %s57
      %p71 = scmp.eq.s32.totalorder %s23, 1
      %p72 = por %p70, %p71
      %p74 = scmp.ne.s32.totalorder %s57, %s73
      %p75 = scmp.eq.s32.totalorder %s23, 0
      %p76 = por %p74, %p75
      %s77 = ssub.s32 %s17, %s24
      %p78 = scmp.eq.s32.totalorder %s77, 0
      %s80 = sadd.s32 %s79, 1
      %s81 = scalar_select %p78, %s79, %s80
      %p84 = pneg %p78
      %p85 = scmp.eq.s32.totalorder %s17, 1
      %p86 = por %p84, %p85
      %p87 = scmp.ne.s32.totalorder %s79, %s82
      %p88 = scmp.eq.s32.totalorder %s17, 0
      %p89 = por %p87, %p88
      %p90 = scmp.ne.s32.totalorder %s79, %s82
      %p91 = scmp.eq.s32.totalorder %s22, 1
      %p92 = por %p90, %p91
      %p93 = scmp.ne.s32.totalorder %s82, %s83
      %p94 = scmp.eq.s32.totalorder %s22, 0
      %p95 = por %p93, %p94
      %p96 = scmp.ne.s32.totalorder %s82, %s83
      %p97 = scmp.eq.s32.totalorder %s23, 1
      %p98 = por %p96, %p97
      %p100 = scmp.ne.s32.totalorder %s83, %s99
      %p101 = scmp.eq.s32.totalorder %s23, 0
      %p102 = por %p100, %p101
      %p103 = scmp.le.s32.totalorder 1, %s17
      %p104 = scmp.lt.s32.totalorder %s17, 3
      %p105 = pnand %p103, %p104
      %p106 = pneg %p105
      // Predicated region
      $region9: #{tpu_custom_call.1} parent=5 // pred_check
        _
      $region10: #{tpu_custom_call.1} parent=5 // pred_check_branch
        %108 = sbr.rel (%p105) target = $region12
      $region11: #{tpu_custom_call.1} parent=5 // pred_region
        %s109 = ssub.s32 %s17, 1
      $region12: #{tpu_custom_call.1} parent=5 // pred_fallthru
        _
      %p110 = scmp.lt.s32.totalorder %s17, 2
      // Predicated region
      $region13: #{tpu_custom_call.1} parent=5 // pred_check
        %p111 = pneg %p110
      $region14: #{tpu_custom_call.1} parent=5 // pred_check_branch
        %113 = sbr.rel (%p111) target = $region16
      $region15: #{tpu_custom_call.1} parent=5 // pred_region
        // Predicated region
        $region17: #{tpu_custom_call.1} parent=15 // pred_check
          %p114 = pneg %p37
        $region18: #{tpu_custom_call.1} parent=15 // pred_check_branch
          %116 = sbr.rel (%p114) target = $region20
        $region19: #{tpu_custom_call.1} parent=15 // pred_region
          %s117 = sand.u32 %s27, 1
          %s118 = scalar_lea.sflag [#allocation3], %s117
          %s119 = sand.u32 %s27, 1
          %s120 = smul.addr %s119, 128
          %s121 = scalar_lea.vmem [#allocation2], %s120
          %s122 = smul.u32 16, %s17
          %s123 = ssub.s32 18, %s122
          %p124 = scmp.lt.s32.totalorder %s123, 16
          %s125 = scalar_select %p124, %s123, 16
          %s126 = smul.u32 128, %s125
          %s128 = ssub.s32 2048, %s126
          %129 = vsyncadd %s118, %s128
          %p130 = scmp.ne.s32.totalorder 0, %s126
          %s131 = smul.addr %s122, 128
          %s132 = scalar_lea.hbm %s0, %s131
          %s133 = smul.u32 8, %s125
          %s134 = sshll.u32 %s121, 4
          %s135 = int_to_ptr.vmem [resolvable:$true] %s134
          %s136 = sshll.u32 %s133, 4
          %140 = dma.hbm_to_vmem [thread:$0]  (%p130), %s132, %s136, %s135, %s118, 128, 128, 8
        $region20: #{tpu_custom_call.1} parent=15 // pred_fallthru
          _
        // Predicated region
        $region21: #{tpu_custom_call.1} parent=15 // pred_check
          %p141 = pneg %p63
        $region22: #{tpu_custom_call.1} parent=15 // pred_check_branch
          %143 = sbr.rel (%p141) target = $region24
        $region23: #{tpu_custom_call.1} parent=15 // pred_region
          %s144 = sand.u32 %s53, 1
          %s145 = scalar_lea.sflag [#allocation6], %s144
          %s146 = sand.u32 %s53, 1
          %s147 = smul.addr %s146, 128
          %s148 = scalar_lea.vmem [#allocation5], %s147
          %s149 = smul.u32 16, %s17
          %s150 = ssub.s32 18, %s149
          %p151 = scmp.lt.s32.totalorder %s150, 16
          %s152 = scalar_select %p151, %s150, 16
          %s153 = smul.u32 128, %s152
          %s155 = ssub.s32 2048, %s153
          %156 = vsyncadd %s145, %s155
          %p157 = scmp.ne.s32.totalorder 0, %s153
          %s158 = smul.addr %s149, 128
          %s159 = scalar_lea.hbm %s1, %s158
          %s160 = smul.u32 8, %s152
          %s161 = sshll.u32 %s148, 4
          %s162 = int_to_ptr.vmem [resolvable:$true] %s161
          %s163 = sshll.u32 %s160, 4
          %167 = dma.hbm_to_vmem [thread:$0]  (%p157), %s159, %s163, %s162, %s145, 128, 128, 8
        $region24: #{tpu_custom_call.1} parent=15 // pred_fallthru
          _
      $region16: #{tpu_custom_call.1} parent=5 // pred_fallthru
        _
      %p168 = scmp.le.s32.totalorder 1, %s17
      %p169 = scmp.lt.s32.totalorder %s17, 3
      %p170 = pnand %p168, %p169
      %p171 = pneg %p170
      // Predicated region
      $region25: #{tpu_custom_call.1} parent=5 // pred_check
        _
      $region26: #{tpu_custom_call.1} parent=5 // pred_check_branch
        %173 = sbr.rel (%p170) target = $region28
      $region27: #{tpu_custom_call.1} parent=5 // pred_region
        %s174 = ssub.s32 %s17, 1
        %s175 = sand.u32 %s30, 1
        %s176 = scalar_lea.sflag [#allocation3], %s175
        %s177 = sand.u32 %s30, 1
        %s178 = smul.addr %s177, 128
        %s179 = scalar_lea.vmem [#allocation2], %s178
        // Predicated region
        $region29: #{tpu_custom_call.1} parent=27 // pred_check
          %p180 = pneg %p43
        $region30: #{tpu_custom_call.1} parent=27 // pred_check_branch
          %182 = sbr.rel (%p180) target = $region32
        $region31: #{tpu_custom_call.1} parent=27 // pred_region
          %183 = dma.done %s176, 2048
        $region32: #{tpu_custom_call.1} parent=27 // pred_fallthru
          _
        %s184 = sand.u32 %s56, 1
        %s185 = scalar_lea.sflag [#allocation6], %s184
        %s186 = sand.u32 %s56, 1
        %s187 = smul.addr %s186, 128
        %s188 = scalar_lea.vmem [#allocation5], %s187
        // Predicated region
        $region33: #{tpu_custom_call.1} parent=27 // pred_check
          %p189 = pneg %p69
        $region34: #{tpu_custom_call.1} parent=27 // pred_check_branch
          %191 = sbr.rel (%p189) target = $region36
        $region35: #{tpu_custom_call.1} parent=27 // pred_region
          %192 = dma.done %s185, 2048
        $region36: #{tpu_custom_call.1} parent=27 // pred_fallthru
          _
        %s193 = sand.u32 %s30, 1
        %s194 = scalar_lea.sflag [#allocation3], %s193
        %s195 = sand.u32 %s30, 1
        %s196 = smul.addr %s195, 128
        %s197 = scalar_lea.vmem [#allocation2], %s196
        %p198 = pneg %p43
        %p199 = pneg %p40
        %s200 = sand.u32 %s56, 1
        %s201 = scalar_lea.sflag [#allocation6], %s200
        %s202 = sand.u32 %s56, 1
        %s203 = smul.addr %s202, 128
        %s204 = scalar_lea.vmem [#allocation5], %s203
        %p205 = pneg %p69
        %p206 = pneg %p66
        %p207 = pneg %p95
        %p208 = pneg %p92
        %s209 = sand.u32 %s82, 1
        %s210 = scalar_lea.sflag [#allocation4], %s209
        %s211 = sand.u32 %s82, 1
        %s212 = smul.addr %s211, 8
        %s213 = scalar_lea.vmem [#allocation7], %s212
        %s214 = smul.u32 16, %s22
        %s215 = ssub.s32 18, %s214
        %p216 = scmp.lt.s32.totalorder %s215, 16
        %s217 = scalar_select %p216, %s215, 16
        %s218 = smul.u32 128, %s217
        %s219 = smul.u32 16, %s22
        %s220 = ssub.s32 18, %s219
        %p221 = scmp.lt.s32.totalorder %s220, 16
        %s222 = scalar_select %p221, %s220, 16
        %s223 = smul.u32 128, %s222
        %s224 = smul.u32 %s22, 128
        %v225 = vlaneseq
        %v226 = vshrl.u32 %v225, 7
        %v227 = vadd.s32 %v226, 8
        %v228 = vadd.s32 %v226, 16
        %v229 = vadd.s32 %v226, 24
        %v230 = vadd.s32 %v226, 32
        %v231 = vadd.s32 %v226, 40
        %v232 = vadd.s32 %v226, 48
        %v233 = vadd.s32 %v226, 56
        %v234 = vld [vmem:[%s179] sm:$0xff]
        %v235 = vld [vmem:[%s179 + $0x8] sm:$0xff]
        %v236 = vld [vmem:[%s179 + $0x10] sm:$0xff]
        %v237 = vld [vmem:[%s179 + $0x18] sm:$0xff]
        %v238 = vld [vmem:[%s179 + $0x20] sm:$0xff]
        %v239 = vld [vmem:[%s179 + $0x28] sm:$0xff]
        %v240 = vld [vmem:[%s179 + $0x30] sm:$0xff]
        %v241 = vld [vmem:[%s179 + $0x38] sm:$0xff]
        %v242 = vld [vmem:[%s188] sm:$0xff]
        %v243 = vld [vmem:[%s188 + $0x8] sm:$0xff]
        %v244 = vld [vmem:[%s188 + $0x10] sm:$0xff]
        %v245 = vld [vmem:[%s188 + $0x18] sm:$0xff]
        %v246 = vld [vmem:[%s188 + $0x20] sm:$0xff]
        %v247 = vld [vmem:[%s188 + $0x28] sm:$0xff]
        %v248 = vld [vmem:[%s188 + $0x30] sm:$0xff]
        %v249 = vld [vmem:[%s188 + $0x38] sm:$0xff]
        %s250 = sadd.s32 %s224, 0
        %v251 = vstv %s250
        %v252 = vadd.s32 %v251, %v226
        %v253 = vadd.s32 %v251, %v227
        %v254 = vadd.s32 %v251, %v228
        %v255 = vadd.s32 %v251, %v229
        %v256 = vadd.s32 %v251, %v230
        %v257 = vadd.s32 %v251, %v231
        %v258 = vadd.s32 %v251, %v232
        %v259 = vadd.s32 %v251, %v233
        %vm260 = vcmp.lt.s32.totalorder %v252, 144
        %vm261 = vcmp.lt.s32.totalorder %v253, 144
        %vm262 = vcmp.lt.s32.totalorder %v254, 144
        %vm263 = vcmp.lt.s32.totalorder %v255, 144
        %vm264 = vcmp.lt.s32.totalorder %v256, 144
        %vm265 = vcmp.lt.s32.totalorder %v257, 144
        %vm266 = vcmp.lt.s32.totalorder %v258, 144
        %vm267 = vcmp.lt.s32.totalorder %v259, 144
        %v268 = vsub.f32 %v234, %v242
        %v269 = vsub.f32 %v235, %v243
        %v270 = vsub.f32 %v236, %v244
        %v271 = vsub.f32 %v237, %v245
        %v272 = vsub.f32 %v238, %v246
        %v273 = vsub.f32 %v239, %v247
        %v274 = vsub.f32 %v240, %v248
        %v275 = vsub.f32 %v241, %v249
        %v276 = vand.u32 2147483647, %v268
        %v277 = vand.u32 2147483647, %v269
        %v278 = vand.u32 2147483647, %v270
        %v279 = vand.u32 2147483647, %v271
        %v280 = vand.u32 2147483647, %v272
        %v281 = vand.u32 2147483647, %v273
        %v282 = vand.u32 2147483647, %v274
        %v283 = vand.u32 2147483647, %v275
        %v284 = vsel %vm260, %v276, 0.0
        %v285 = vsel %vm261, %v277, 0.0
        %v286 = vsel %vm262, %v278, 0.0
        %v287 = vsel %vm263, %v279, 0.0
        %v288 = vsel %vm264, %v280, 0.0
        %v289 = vsel %vm265, %v281, 0.0
        %v290 = vsel %vm266, %v282, 0.0
        %v291 = vsel %vm267, %v283, 0.0
        %v292 = vadd.f32 %v284, %v285
        %v293 = vadd.f32 %v292, %v286
        %v294 = vadd.f32 %v293, %v287
        %v295 = vadd.f32 %v294, %v288
        %v296 = vadd.f32 %v295, %v289
        %v297 = vadd.f32 %v296, %v290
        %v298 = vadd.f32 %v297, %v291
        %v299 = vadd.f32 %v298, 0.0
        %s300 = scalar_lea.vmem %s179, 64 [#allocation2]
        %v301 = vld [vmem:[%s300] sm:$0xff]
        %v302 = vld [vmem:[%s300 + $0x8] sm:$0xff]
        %v303 = vld [vmem:[%s300 + $0x10] sm:$0xff]
        %v304 = vld [vmem:[%s300 + $0x18] sm:$0xff]
        %v305 = vld [vmem:[%s300 + $0x20] sm:$0xff]
        %v306 = vld [vmem:[%s300 + $0x28] sm:$0xff]
        %v307 = vld [vmem:[%s300 + $0x30] sm:$0xff]
        %v308 = vld [vmem:[%s300 + $0x38] sm:$0xff]
        %s309 = scalar_lea.vmem %s188, 64 [#allocation5]
        %v310 = vld [vmem:[%s309] sm:$0xff]
        %v311 = vld [vmem:[%s309 + $0x8] sm:$0xff]
        %v312 = vld [vmem:[%s309 + $0x10] sm:$0xff]
        %v313 = vld [vmem:[%s309 + $0x18] sm:$0xff]
        %v314 = vld [vmem:[%s309 + $0x20] sm:$0xff]
        %v315 = vld [vmem:[%s309 + $0x28] sm:$0xff]
        %v316 = vld [vmem:[%s309 + $0x30] sm:$0xff]
        %v317 = vld [vmem:[%s309 + $0x38] sm:$0xff]
        %s318 = sadd.s32 %s224, 64
        %v319 = vstv %s318
        %v320 = vadd.s32 %v319, %v226
        %v321 = vadd.s32 %v319, %v227
        %v322 = vadd.s32 %v319, %v228
        %v323 = vadd.s32 %v319, %v229
        %v324 = vadd.s32 %v319, %v230
        %v325 = vadd.s32 %v319, %v231
        %v326 = vadd.s32 %v319, %v232
        %v327 = vadd.s32 %v319, %v233
        %vm328 = vcmp.lt.s32.totalorder %v320, 144
        %vm329 = vcmp.lt.s32.totalorder %v321, 144
        %vm330 = vcmp.lt.s32.totalorder %v322, 144
        %vm331 = vcmp.lt.s32.totalorder %v323, 144
        %vm332 = vcmp.lt.s32.totalorder %v324, 144
        %vm333 = vcmp.lt.s32.totalorder %v325, 144
        %vm334 = vcmp.lt.s32.totalorder %v326, 144
        %vm335 = vcmp.lt.s32.totalorder %v327, 144
        %v336 = vsub.f32 %v301, %v310
        %v337 = vsub.f32 %v302, %v311
        %v338 = vsub.f32 %v303, %v312
        %v339 = vsub.f32 %v304, %v313
        %v340 = vsub.f32 %v305, %v314
        %v341 = vsub.f32 %v306, %v315
        %v342 = vsub.f32 %v307, %v316
        %v343 = vsub.f32 %v308, %v317
        %v344 = vand.u32 2147483647, %v336
        %v345 = vand.u32 2147483647, %v337
        %v346 = vand.u32 2147483647, %v338
        %v347 = vand.u32 2147483647, %v339
        %v348 = vand.u32 2147483647, %v340
        %v349 = vand.u32 2147483647, %v341
        %v350 = vand.u32 2147483647, %v342
        %v351 = vand.u32 2147483647, %v343
        %v352 = vsel %vm328, %v344, 0.0
        %v353 = vsel %vm329, %v345, 0.0
        %v354 = vsel %vm330, %v346, 0.0
        %v355 = vsel %vm331, %v347, 0.0
        %v356 = vsel %vm332, %v348, 0.0
        %v357 = vsel %vm333, %v349, 0.0
        %v358 = vsel %vm334, %v350, 0.0
        %v359 = vsel %vm335, %v351, 0.0
        %v360 = vadd.f32 %v352, %v353
        %v361 = vadd.f32 %v360, %v354
        %v362 = vadd.f32 %v361, %v355
        %v363 = vadd.f32 %v362, %v356
        %v364 = vadd.f32 %v363, %v357
        %v365 = vadd.f32 %v364, %v358
        %v366 = vadd.f32 %v365, %v359
        %v367 = vadd.f32 %v299, %v366
        %368 = vst [vmem:[%s213] sm:$0xff] %v367
        %s369 = sand.u32 %s82, 1
        %s370 = scalar_lea.sflag [#allocation4], %s369
        %s371 = sand.u32 %s82, 1
        %s372 = smul.addr %s371, 8
        %s373 = scalar_lea.vmem [#allocation7], %s372
        // Predicated region
        $region37: #{tpu_custom_call.1} parent=27 // pred_check
          %p374 = pneg %p92
        $region38: #{tpu_custom_call.1} parent=27 // pred_check_branch
          %376 = sbr.rel (%p374) target = $region40
        $region39: #{tpu_custom_call.1} parent=27 // pred_region
          %s378 = ssub.s32 128, 128
          %379 = vsyncadd %s370, %s378
          %s380 = smul.addr %s22, 128
          %s381 = scalar_lea.hbm %s2, %s380
          %s383 = sshll.u32 %s373, 4
          %s384 = int_to_ptr.vmem [resolvable:$true] %s383
          %386 = dma.vmem_to_hbm [thread:$0]  %s384, 128, %s381, %s370
        $region40: #{tpu_custom_call.1} parent=27 // pred_fallthru
          _
      $region28: #{tpu_custom_call.1} parent=5 // pred_fallthru
        _
      %p387 = scmp.le.s32.totalorder 2, %s17
      // Predicated region
      $region41: #{tpu_custom_call.1} parent=5 // pred_check
        %p388 = pneg %p387
      $region42: #{tpu_custom_call.1} parent=5 // pred_check_branch
        %390 = sbr.rel (%p388) target = $region44
      $region43: #{tpu_custom_call.1} parent=5 // pred_region
        %s391 = ssub.s32 %s17, 2
        // Predicated region
        $region45: #{tpu_custom_call.1} parent=43 // pred_check
          %p392 = pneg %p98
        $region46: #{tpu_custom_call.1} parent=43 // pred_check_branch
          %394 = sbr.rel (%p392) target = $region48
        $region47: #{tpu_custom_call.1} parent=43 // pred_region
          %s395 = sand.u32 %s83, 1
          %s396 = scalar_lea.sflag [#allocation4], %s395
          %s397 = sand.u32 %s83, 1
          %s398 = smul.addr %s397, 8
          %s399 = scalar_lea.vmem [#allocation7], %s398
          %400 = dma.done %s396, 128
        $region48: #{tpu_custom_call.1} parent=43 // pred_fallthru
          _
      $region44: #{tpu_custom_call.1} parent=5 // pred_fallthru
        _
    $region6: #{tpu_custom_call.1} parent=1 // loop_footer
      %s21 = sadd.s32 1, %s17
    $region7: #{tpu_custom_call.1} parent=1 // loop_footer_branch
      %16 = sbr.rel target = $region3
    $region8: #{tpu_custom_call.1} parent=1 // loop_exit
      _
    %401 = vsyncpa [#allocation3], 1
    %s402 = scalar_lea.sflag [#allocation3], 1
    %403 = vsyncpa %s402, 1
    %404 = vsyncpa [#allocation6], 1
    %s405 = scalar_lea.sflag [#allocation6], 1
    %406 = vsyncpa %s405, 1
    %407 = vsyncpa [#allocation4], 1
    %s408 = scalar_lea.sflag [#allocation4], 1
    %409 = vsyncpa %s408, 1

</llo_original>
